<compile_context>
chip_gen: v6e
topology: v6e:2x2x1
jax: 0.10.0
libtpu: 0.0.40
codegen_flags: <defaults>
</compile_context>

<pallas_src>
import functools
import math

import jax
import jax.numpy as jnp
from jax.experimental import pallas as pl
from jax.experimental.pallas import tpu as pltpu


def mlp_logsoftmax_kernel(x_ref, w1_ref, b1_ref, w2_ref, b2_ref, w3_ref, b3_ref, o_ref):
    # Layer 1: bf16 x bf16 on the MXU, f32 accumulate; bias + ReLU in f32 on the VPU.
    h1 = jnp.dot(x_ref[...], w1_ref[...], preferred_element_type=jnp.float32) + b1_ref[...]
    h1 = jnp.maximum(h1, 0.0)

    # Layer 2 (cast activations back to bf16 only for the matmul operands).
    h2 = jnp.dot(h1.astype(jnp.bfloat16), w2_ref[...],
                 preferred_element_type=jnp.float32) + b2_ref[...]
    h2 = jnp.maximum(h2, 0.0)

    # Layer 3 (logits).
    logits = jnp.dot(h2.astype(jnp.bfloat16), w3_ref[...],
                     preferred_element_type=jnp.float32) + b3_ref[...]

    # Numerically-stable log_softmax along dim=1 (f32; lane-reduce on the XLU,
    # exp/log on the EUP slot — both off the VALU/MXU critical path).
    m = jnp.max(logits, axis=1, keepdims=True)
    shifted = logits - m
    lse = jnp.log(jnp.sum(jnp.exp(shifted), axis=1, keepdims=True))
    o_ref[...] = (shifted - lse).astype(o_ref.dtype)


def _round_up(n, m):
    return ((n + m - 1) // m) * m


@functools.partial(jax.jit, static_argnames=("batch_tile",))
def net_forward(x, params, *, batch_tile=512):
    """x: (batch, in_features) f32/bf16. Returns (batch, out_features) f32 log-probs."""
    w1, b1, w2, b2, w3, b3 = params
    batch, in_dim = x.shape
    h1_dim = w1.shape[1]
    h2_dim = w2.shape[1]
    out_dim = w3.shape[1]

    # Batch tile: multiple of 8 (sublane), capped at batch_tile; pad batch up to a multiple.
    tb = min(batch_tile, _round_up(batch, 8))
    padded = _round_up(batch, tb)

    x_bf16 = x.astype(jnp.bfloat16)
    if padded != batch:
        x_bf16 = jnp.pad(x_bf16, ((0, padded - batch), (0, 0)))

    grid = (padded // tb,)

    def resident(shape):
        # Same block every grid step -> weights/biases DMA'd once, VMEM-resident thereafter.
        return pl.BlockSpec(shape, lambda i: (0, 0))

    flops = 2 * padded * (in_dim * h1_dim + h1_dim * h2_dim + h2_dim * out_dim)
    bytes_accessed = (
        x_bf16.size * 2                               # bf16 activations in
        + (w1.size + w2.size + w3.size) * 2           # bf16 weights
        + (b1.size + b2.size + b3.size) * 4           # f32 biases
        + padded * out_dim * 4                        # f32 output
    )
    cost = pl.CostEstimate(flops=flops,
                           transcendentals=padded * out_dim,
                           bytes_accessed=bytes_accessed)

    out = pl.pallas_call(
        mlp_logsoftmax_kernel,
        out_shape=jax.ShapeDtypeStruct((padded, out_dim), jnp.float32),
        grid_spec=pltpu.PrefetchScalarGridSpec(
            num_scalar_prefetch=0,
            grid=grid,
            in_specs=[
                pl.BlockSpec((tb, in_dim), lambda i: (i, 0)),   # x: streamed per batch tile
                resident((in_dim, h1_dim)),
                resident((1, h1_dim)),
                resident((h1_dim, h2_dim)),
                resident((1, h2_dim)),
                resident((h2_dim, out_dim)),
                resident((1, out_dim)),
            ],
            out_specs=pl.BlockSpec((tb, out_dim), lambda i: (i, 0)),
        ),
        compiler_params=pltpu.CompilerParams(
            dimension_semantics=("parallel",),  # shard batch tiles across TCs (v7x megacore)
        ),
        cost_estimate=cost,
    )(x_bf16, w1, b1, w2, b2, w3, b3)

    return out[:batch] if padded != batch else out


def init_params(key, inputs_num, outputs_num):
    """Deterministic init mimicking torch.nn.Linear default (U(-1/sqrt(fan_in), +1/sqrt(fan_in))).

    Weights are stored in bf16 (matmul operands); biases stay f32 (added post-accumulation).
    """
    dims = [(inputs_num, 1024), (1024, 128), (128, outputs_num)]
    params = []
    for (fan_in, fan_out) in dims:
        key, kw, kb = jax.random.split(key, 3)
        bound = 1.0 / math.sqrt(fan_in)
        w = jax.random.uniform(kw, (fan_in, fan_out), jnp.float32, -bound, bound)
        b = jax.random.uniform(kb, (1, fan_out), jnp.float32, -bound, bound)
        params += [w.astype(jnp.bfloat16), b]
    return tuple(params)


def _reference_forward(x, params):
    """Pure-JAX f32 reference using the same (bf16-quantized) params."""
    w1, b1, w2, b2, w3, b3 = params
    h = x.astype(jnp.bfloat16).astype(jnp.float32)
    h = jnp.maximum(h @ w1.astype(jnp.float32) + b1, 0.0)
    h = jnp.maximum(h @ w2.astype(jnp.float32) + b2, 0.0)
    logits = h @ w3.astype(jnp.float32) + b3
    return jax.nn.log_softmax(logits, axis=1)


if __name__ == "__main__":
    inputs_num = 32
    outputs_num = 10
    batch = 8

    key = jax.random.PRNGKey(0)
    key, kx = jax.random.split(key)
    x = jax.random.normal(kx, (batch, inputs_num), jnp.float32)
    params = init_params(key, inputs_num, outputs_num)

    out = net_forward(x, params)
    jax.block_until_ready(out)

    assert out.shape == (batch, outputs_num)

    # sanity: log_softmax rows should exp-sum to 1
    row_sums = jnp.sum(jnp.exp(out), axis=1)
    assert bool(jnp.all(jnp.abs(row_sums - 1.0) < 1e-4))

    # correctness vs. pure-JAX reference (loose tolerance: bf16 MXU vs f32 matmul rounding)
    ref = _reference_forward(x, params)
    assert bool(jnp.all(jnp.abs(out - ref) < 5e-2))

    print("KERNEL_OK")
</pallas_src>

<mosaic_0001>
module attributes {stable_mosaic.version = 11 : i64} {
  func.func @mlp_logsoftmax_kernel(%arg0: i32, %arg1: memref<8x32xbf16, #tpu.memory_space<vmem>>, %arg2: memref<32x1024xbf16, #tpu.memory_space<vmem>>, %arg3: memref<1x1024xf32, #tpu.memory_space<vmem>>, %arg4: memref<1024x128xbf16, #tpu.memory_space<vmem>>, %arg5: memref<1x128xf32, #tpu.memory_space<vmem>>, %arg6: memref<128x10xbf16, #tpu.memory_space<vmem>>, %arg7: memref<1x10xf32, #tpu.memory_space<vmem>>, %arg8: memref<8x10xf32, #tpu.memory_space<vmem>>) attributes {dimension_semantics = [#tpu.dimension_semantics<parallel>], iteration_bounds = array<i64: 1>, scalar_prefetch = 0 : i64, scratch_operands = 0 : i64, tpu.core_type = #tpu.core_type<tc>, window_params = [{transform_indices = @transform_0, window_bounds = array<i64: 8, 32>}, {pipeline_mode = #tpu.pipeline_mode<synchronous>, transform_indices = @transform_1, window_bounds = array<i64: 32, 1024>}, {pipeline_mode = #tpu.pipeline_mode<synchronous>, transform_indices = @transform_2, window_bounds = array<i64: 1, 1024>}, {pipeline_mode = #tpu.pipeline_mode<synchronous>, transform_indices = @transform_3, window_bounds = array<i64: 1024, 128>}, {pipeline_mode = #tpu.pipeline_mode<synchronous>, transform_indices = @transform_4, window_bounds = array<i64: 1, 128>}, {pipeline_mode = #tpu.pipeline_mode<synchronous>, transform_indices = @transform_5, window_bounds = array<i64: 128, 10>}, {pipeline_mode = #tpu.pipeline_mode<synchronous>, transform_indices = @transform_6, window_bounds = array<i64: 1, 10>}, {transform_indices = @transform_7, window_bounds = array<i64: 8, 10>}]} {
    %c0 = arith.constant 0 : index
    %c0_0 = arith.constant 0 : index
    %0 = vector.load %arg1[%c0, %c0_0] : memref<8x32xbf16, #tpu.memory_space<vmem>>, vector<8x32xbf16>
    %c0_1 = arith.constant 0 : index
    %c0_2 = arith.constant 0 : index
    %1 = vector.load %arg2[%c0_1, %c0_2] : memref<32x1024xbf16, #tpu.memory_space<vmem>>, vector<32x1024xbf16>
    %cst = arith.constant dense<0.000000e+00> : vector<8x1024xf32>
    %2 = tpu.matmul %0, %1, %cst {dimension_numbers = #tpu.dot_dimension_numbers<[1], [0], [0], [1], [0, 0, 1, 1], [], []>} : vector<8x32xbf16>, vector<32x1024xbf16>, vector<8x1024xf32> -> vector<8x1024xf32>
    %c0_3 = arith.constant 0 : index
    %c0_4 = arith.constant 0 : index
    %3 = vector.load %arg3[%c0_3, %c0_4] : memref<1x1024xf32, #tpu.memory_space<vmem>>, vector<1x1024xf32>
    %4 = vector.broadcast %3 : vector<1x1024xf32> to vector<8x1024xf32>
    %5 = arith.addf %2, %4 : vector<8x1024xf32>
    %cst_5 = arith.constant 0.000000e+00 : f32
    %6 = vector.broadcast %cst_5 : f32 to vector<8x1024xf32>
    %7 = arith.maximumf %5, %6 : vector<8x1024xf32>
    %8 = arith.truncf %7 : vector<8x1024xf32> to vector<8x1024xbf16>
    %c0_6 = arith.constant 0 : index
    %c0_7 = arith.constant 0 : index
    %9 = vector.load %arg4[%c0_6, %c0_7] : memref<1024x128xbf16, #tpu.memory_space<vmem>>, vector<1024x128xbf16>
    %cst_8 = arith.constant dense<0.000000e+00> : vector<8x128xf32>
    %10 = tpu.matmul %8, %9, %cst_8 {dimension_numbers = #tpu.dot_dimension_numbers<[1], [0], [0], [1], [0, 0, 1, 1], [], []>} : vector<8x1024xbf16>, vector<1024x128xbf16>, vector<8x128xf32> -> vector<8x128xf32>
    %c0_9 = arith.constant 0 : index
    %c0_10 = arith.constant 0 : index
    %11 = vector.load %arg5[%c0_9, %c0_10] : memref<1x128xf32, #tpu.memory_space<vmem>>, vector<1x128xf32>
    %12 = vector.broadcast %11 : vector<1x128xf32> to vector<8x128xf32>
    %13 = arith.addf %10, %12 : vector<8x128xf32>
    %cst_11 = arith.constant 0.000000e+00 : f32
    %14 = vector.broadcast %cst_11 : f32 to vector<8x128xf32>
    %15 = arith.maximumf %13, %14 : vector<8x128xf32>
    %16 = arith.truncf %15 : vector<8x128xf32> to vector<8x128xbf16>
    %c0_12 = arith.constant 0 : index
    %c0_13 = arith.constant 0 : index
    %17 = vector.load %arg6[%c0_12, %c0_13] : memref<128x10xbf16, #tpu.memory_space<vmem>>, vector<128x10xbf16>
    %cst_14 = arith.constant dense<0.000000e+00> : vector<8x10xf32>
    %18 = tpu.matmul %16, %17, %cst_14 {dimension_numbers = #tpu.dot_dimension_numbers<[1], [0], [0], [1], [0, 0, 1, 1], [], []>} : vector<8x128xbf16>, vector<128x10xbf16>, vector<8x10xf32> -> vector<8x10xf32>
    %c0_15 = arith.constant 0 : index
    %c0_16 = arith.constant 0 : index
    %19 = vector.load %arg7[%c0_15, %c0_16] : memref<1x10xf32, #tpu.memory_space<vmem>>, vector<1x10xf32>
    %20 = vector.broadcast %19 : vector<1x10xf32> to vector<8x10xf32>
    %21 = arith.addf %18, %20 : vector<8x10xf32>
    %cst_17 = arith.constant dense<0xFF800000> : vector<8xf32>
    %22 = vector.multi_reduction <maximumf>, %21, %cst_17 [1] : vector<8x10xf32> to vector<8xf32>
    %23 = vector.shape_cast %22 : vector<8xf32> to vector<8x1xf32>
    %24 = vector.broadcast %23 : vector<8x1xf32> to vector<8x10xf32>
    %25 = arith.subf %21, %24 : vector<8x10xf32>
    %26 = math.exp %25 : vector<8x10xf32>
    %cst_18 = arith.constant dense<0.000000e+00> : vector<8xf32>
    %27 = vector.multi_reduction <add>, %26, %cst_18 [1] : vector<8x10xf32> to vector<8xf32>
    %28 = vector.shape_cast %27 : vector<8xf32> to vector<8x1xf32>
    %29 = math.log %28 : vector<8x1xf32>
    %30 = vector.broadcast %29 : vector<8x1xf32> to vector<8x10xf32>
    %31 = arith.subf %25, %30 : vector<8x10xf32>
    %c0_19 = arith.constant 0 : index
    %c0_20 = arith.constant 0 : index
    %32 = vector.load %arg8[%c0_19, %c0_20] : memref<8x10xf32, #tpu.memory_space<vmem>>, vector<8x10xf32>
    tpu.vector_store %arg8[%c0_19, %c0_20], %31 {strides = array<i32>} : memref<8x10xf32, #tpu.memory_space<vmem>>, vector<8x10xf32>,
    return
  }
  func.func @transform_0(%arg0: i32) -> (i32, i32) {
    %c0_i32 = arith.constant 0 : i32
    %c0_i32_0 = arith.constant 0 : i32
    return %arg0, %c0_i32 : i32, i32
  }
  func.func @transform_1(%arg0: i32) -> (i32, i32) {
    %c0_i32 = arith.constant 0 : i32
    %c0_i32_0 = arith.constant 0 : i32
    %c0_i32_1 = arith.constant 0 : i32
    return %c0_i32, %c0_i32_0 : i32, i32
  }
  func.func @transform_2(%arg0: i32) -> (i32, i32) {
    %c0_i32 = arith.constant 0 : i32
    %c0_i32_0 = arith.constant 0 : i32
    %c0_i32_1 = arith.constant 0 : i32
    return %c0_i32, %c0_i32_0 : i32, i32
  }
  func.func @transform_3(%arg0: i32) -> (i32, i32) {
    %c0_i32 = arith.constant 0 : i32
    %c0_i32_0 = arith.constant 0 : i32
    %c0_i32_1 = arith.constant 0 : i32
    return %c0_i32, %c0_i32_0 : i32, i32
  }
  func.func @transform_4(%arg0: i32) -> (i32, i32) {
    %c0_i32 = arith.constant 0 : i32
    %c0_i32_0 = arith.constant 0 : i32
    %c0_i32_1 = arith.constant 0 : i32
    return %c0_i32, %c0_i32_0 : i32, i32
  }
  func.func @transform_5(%arg0: i32) -> (i32, i32) {
    %c0_i32 = arith.constant 0 : i32
    %c0_i32_0 = arith.constant 0 : i32
    %c0_i32_1 = arith.constant 0 : i32
    return %c0_i32, %c0_i32_0 : i32, i32
  }
  func.func @transform_6(%arg0: i32) -> (i32, i32) {
    %c0_i32 = arith.constant 0 : i32
    %c0_i32_0 = arith.constant 0 : i32
    %c0_i32_1 = arith.constant 0 : i32
    return %c0_i32, %c0_i32_0 : i32, i32
  }
  func.func @transform_7(%arg0: i32) -> (i32, i32) {
    %c0_i32 = arith.constant 0 : i32
    %c0_i32_0 = arith.constant 0 : i32
    return %arg0, %c0_i32 : i32, i32
  }
}

</mosaic_0001>

<llo_original>
// kernel: net_forward.1
$region0: #{net_forward.1}
  #allocation0 [shape = 'u32[]', space=smem, size = 0x4, offset = 0x4, fixed_abs, tag = 'smem constant byte address 0x4 - core index']
  #allocation1 [shape = 'u32[144,128]{1,0:T(1,128)}', space=vmem, size = 0x12000, scoped, tag = 'internal scratch']
  %s0 = inlined_call_operand.vmem [shape: bf16[8,32], index: 0, kind: input, shape index: {}]
  %s1 = inlined_call_operand.hbm [shape: bf16[32,1024], index: 1, kind: input, shape index: {}]
  %s2 = inlined_call_operand.vmem [shape: f32[1,1024], index: 2, kind: input, shape index: {}]
  %s3 = inlined_call_operand.hbm [shape: bf16[1024,128], index: 3, kind: input, shape index: {}]
  %s4 = inlined_call_operand.vmem [shape: f32[1,128], index: 4, kind: input, shape index: {}]
  %s5 = inlined_call_operand.vmem [shape: bf16[128,10], index: 5, kind: input, shape index: {}]
  %s6 = inlined_call_operand.vmem [shape: f32[1,10], index: 6, kind: input, shape index: {}]
  %s7 = inlined_call_operand.hbm [shape: f32[8,10], index: 7, kind: output, shape index: {}]
  %s8 = sld [smem:[#allocation0]]
  $region46: #{net_forward.1} parent=0
    _
  %s10 = ssub.s32 1, %s8
  %s11 = scalar_select 0, %s10, %s8
  $region1: #{net_forward.1} parent=0
    #allocation2 [shape = 'u8[65536]{0}', space=vmem, size = 0x10000, scoped, tag = 'input window, operand 1, single buffered']
    #allocation3 [shape = 's32[1]{0}', space=sflag, size = 0x4, scoped, tag = 'scoped memory for net_forward.1']
    #allocation4 [shape = 's32[1]{0}', space=sflag, size = 0x4, scoped, tag = 'scoped memory for net_forward.1']
    #allocation5 [shape = 'u8[262144]{0}', space=vmem, size = 0x40000, scoped, tag = 'input window, operand 3, single buffered']
    #allocation6 [shape = 's32[1]{0}', space=sflag, size = 0x4, scoped, tag = 'scoped memory for net_forward.1']
    #allocation7 [shape = 'u8[4096]{0}', space=vmem, size = 0x1000, scoped, tag = 'output window, operand 0, single buffered']
    %12 = vsyncpa [#allocation3], 0
    %13 = vsyncpa [#allocation6], 0
    %14 = vsyncpa [#allocation4], 0
    // Predicated region
    $region2: #{net_forward.1} parent=1 // pred_check
      _
    $region3: #{net_forward.1} parent=1 // pred_check_branch
      %16 = sbr.rel (0) target = $region5
    $region4: #{net_forward.1} parent=1 // pred_region
      _
    $region5: #{net_forward.1} parent=1 // pred_fallthru
      _
    // Predicated region
    $region6: #{net_forward.1} parent=1 // pred_check
      _
    $region7: #{net_forward.1} parent=1 // pred_check_branch
      %18 = sbr.rel (0) target = $region9
    $region8: #{net_forward.1} parent=1 // pred_region
      %s20 = ssub.s32 2048, 2048
      %21 = vsyncadd [#allocation3], %s20
      %s22 = sshll.u32 [#allocation2], 4
      %s23 = int_to_ptr.vmem [resolvable:$true] %s22
      %28 = dma.hbm_to_vmem [thread:$0]  %s1, 2048, %s23, [#allocation3], 512, 512, 32
    $region9: #{net_forward.1} parent=1 // pred_fallthru
      _
    // Predicated region
    $region10: #{net_forward.1} parent=1 // pred_check
      _
    $region11: #{net_forward.1} parent=1 // pred_check_branch
      %30 = sbr.rel (0) target = $region13
    $region12: #{net_forward.1} parent=1 // pred_region
      _
    $region13: #{net_forward.1} parent=1 // pred_fallthru
      _
    // Predicated region
    $region14: #{net_forward.1} parent=1 // pred_check
      _
    $region15: #{net_forward.1} parent=1 // pred_check_branch
      %32 = sbr.rel (0) target = $region17
    $region16: #{net_forward.1} parent=1 // pred_region
      %s34 = ssub.s32 8192, 8192
      %35 = vsyncadd [#allocation6], %s34
      %s36 = sshll.u32 [#allocation5], 4
      %s37 = int_to_ptr.vmem [resolvable:$true] %s36
      %42 = dma.hbm_to_vmem [thread:$0]  %s3, 8192, %s37, [#allocation6], 64, 64, 4
    $region17: #{net_forward.1} parent=1 // pred_fallthru
      _
    // Predicated region
    $region18: #{net_forward.1} parent=1 // pred_check
      _
    $region19: #{net_forward.1} parent=1 // pred_check_branch
      %44 = sbr.rel (0) target = $region21
    $region20: #{net_forward.1} parent=1 // pred_region
      _
    $region21: #{net_forward.1} parent=1 // pred_fallthru
      _
    // Predicated region
    $region22: #{net_forward.1} parent=1 // pred_check
      _
    $region23: #{net_forward.1} parent=1 // pred_check_branch
      %46 = sbr.rel (0) target = $region25
    $region24: #{net_forward.1} parent=1 // pred_region
      _
    $region25: #{net_forward.1} parent=1 // pred_fallthru
      _
    // Predicated region
    $region26: #{net_forward.1} parent=1 // pred_check
      _
    $region27: #{net_forward.1} parent=1 // pred_check_branch
      %48 = sbr.rel (0) target = $region29
    $region28: #{net_forward.1} parent=1 // pred_region
      _
    $region29: #{net_forward.1} parent=1 // pred_fallthru
      _
    // Predicated region
    $region30: #{net_forward.1} parent=1 // pred_check
      _
    $region31: #{net_forward.1} parent=1 // pred_check_branch
      %50 = sbr.rel (0) target = $region33
    $region32: #{net_forward.1} parent=1 // pred_region
      %51 = dma.done [#allocation3], 2048
    $region33: #{net_forward.1} parent=1 // pred_fallthru
      _
    // Predicated region
    $region34: #{net_forward.1} parent=1 // pred_check
      _
    $region35: #{net_forward.1} parent=1 // pred_check_branch
      %53 = sbr.rel (0) target = $region37
    $region36: #{net_forward.1} parent=1 // pred_region
      %54 = dma.done [#allocation6], 8192
    $region37: #{net_forward.1} parent=1 // pred_fallthru
      _
    %v56 = vld [vmem:[%s0] sm:$0xf]
    %v57 = vld [vmem:[#allocation2] sm:$0xff]
    %v58 = vld [vmem:[#allocation2 + $0x8] sm:$0xff]
    %v59 = vld [vmem:[#allocation2 + $0x10] sm:$0xff]
    %v60 = vld [vmem:[#allocation2 + $0x18] sm:$0xff]
    %v61 = vld [vmem:[#allocation2 + $0x20] sm:$0xff]
    %v62 = vld [vmem:[#allocation2 + $0x28] sm:$0xff]
    %v63 = vld [vmem:[#allocation2 + $0x30] sm:$0xff]
    %v64 = vld [vmem:[#allocation2 + $0x38] sm:$0xff]
    %v65 = vld [vmem:[#allocation2 + $0x40] sm:$0xff]
    %v66 = vld [vmem:[#allocation2 + $0x48] sm:$0xff]
    %v67 = vld [vmem:[#allocation2 + $0x50] sm:$0xff]
    %v68 = vld [vmem:[#allocation2 + $0x58] sm:$0xff]
    %v69 = vld [vmem:[#allocation2 + $0x60] sm:$0xff]
    %v70 = vld [vmem:[#allocation2 + $0x68] sm:$0xff]
    %v71 = vld [vmem:[#allocation2 + $0x70] sm:$0xff]
    %v72 = vld [vmem:[#allocation2 + $0x78] sm:$0xff]
    %v73 = vld [vmem:[%s2] sm:$0xff]
    %v75 = vlaneseq
    %v76 = vshrl.u32 %v75, 7
    %v77 = vsub.s32 0, %v76
    %v78 = vrot.slane %v73, %v77
    %v79 = vlaneseq
    %v80 = vshrl.u32 %v79, 7
    %v81 = vsub.s32 1, %v80
    %v82 = vrot.slane %v73, %v81
    %v83 = vlaneseq
    %v84 = vshrl.u32 %v83, 7
    %v85 = vsub.s32 2, %v84
    %v86 = vrot.slane %v73, %v85
    %v87 = vlaneseq
    %v88 = vshrl.u32 %v87, 7
    %v89 = vsub.s32 3, %v88
    %v90 = vrot.slane %v73, %v89
    %v91 = vlaneseq
    %v92 = vshrl.u32 %v91, 7
    %v93 = vsub.s32 4, %v92
    %v94 = vrot.slane %v73, %v93
    %v95 = vlaneseq
    %v96 = vshrl.u32 %v95, 7
    %v97 = vsub.s32 5, %v96
    %v98 = vrot.slane %v73, %v97
    %v99 = vlaneseq
    %v100 = vshrl.u32 %v99, 7
    %v101 = vsub.s32 6, %v100
    %v102 = vrot.slane %v73, %v101
    %v103 = vlaneseq
    %v104 = vshrl.u32 %v103, 7
    %v105 = vsub.s32 7, %v104
    %v106 = vrot.slane %v73, %v105
    %v131 = vunpack.c.l.b16 %v57
    %v132 = vunpack.c.h.b16 %v57
    %v133 = vunpack.c.l.b16 %v58
    %v134 = vunpack.c.h.b16 %v58
    %v135 = vunpack.c.l.b16 %v59
    %v136 = vunpack.c.h.b16 %v59
    %v137 = vunpack.c.l.b16 %v60
    %v138 = vunpack.c.h.b16 %v60
    %v139 = vunpack.c.l.b16 %v61
    %v140 = vunpack.c.h.b16 %v61
    %v141 = vunpack.c.l.b16 %v62
    %v142 = vunpack.c.h.b16 %v62
    %v143 = vunpack.c.l.b16 %v63
    %v144 = vunpack.c.h.b16 %v63
    %v145 = vunpack.c.l.b16 %v64
    %v146 = vunpack.c.h.b16 %v64
    %v147 = vunpack.c.l.b16 %v65
    %v148 = vunpack.c.h.b16 %v65
    %v149 = vunpack.c.l.b16 %v66
    %v150 = vunpack.c.h.b16 %v66
    %v151 = vunpack.c.l.b16 %v67
    %v152 = vunpack.c.h.b16 %v67
    %v153 = vunpack.c.l.b16 %v68
    %v154 = vunpack.c.h.b16 %v68
    %v155 = vunpack.c.l.b16 %v69
    %v156 = vunpack.c.h.b16 %v69
    %v157 = vunpack.c.l.b16 %v70
    %v158 = vunpack.c.h.b16 %v70
    %v159 = vunpack.c.l.b16 %v71
    %v160 = vunpack.c.h.b16 %v71
    %v161 = vunpack.c.l.b16 %v72
    %v162 = vunpack.c.h.b16 %v72
    %v163 = vpack.c.b16 %v139, %v131
    %v164 = vpack.c.b16 %v140, %v132
    %v165 = vpack.c.b16 %v141, %v133
    %v166 = vpack.c.b16 %v142, %v134
    %v167 = vpack.c.b16 %v143, %v135
    %v168 = vpack.c.b16 %v144, %v136
    %v169 = vpack.c.b16 %v145, %v137
    %v170 = vpack.c.b16 %v146, %v138
    %v171 = vpack.c.b16 %v155, %v147
    %v172 = vpack.c.b16 %v156, %v148
    %v173 = vpack.c.b16 %v157, %v149
    %v174 = vpack.c.b16 %v158, %v150
    %v175 = vpack.c.b16 %v159, %v151
    %v176 = vpack.c.b16 %v160, %v152
    %v177 = vpack.c.b16 %v161, %v153
    %v178 = vpack.c.b16 %v162, %v154
    %vm195 = vcmask 261120
    %v197 = vsel %vm195, %v56, 0
    %199 = vmatprep.subr.bf16.mxu0 0
    %200 = vmatpush1.bf16.msra.mxu0 0
    %201 = vmatprep.subr.bf16.mxu0 0
    %202 = vmatpush1.bf16.msra.mxu0 0
    %203 = vmatprep.subr.bf16.mxu0 0
    %204 = vmatpush1.bf16.msra.mxu0 0
    %205 = vmatprep.subr.bf16.mxu0 0
    %206 = vmatpush1.bf16.msra.mxu0 0
    %207 = vmatprep.subr.bf16.mxu0 0
    %208 = vmatpush1.bf16.msra.mxu0 0
    %209 = vmatprep.subr.bf16.mxu0 0
    %210 = vmatpush1.bf16.msra.mxu0 0
    %211 = vmatprep.subr.bf16.mxu0 %v172
    %212 = vmatpush1.bf16.msra.mxu0 %v171
    %213 = vmatprep.subr.bf16.mxu0 %v164
    %214 = vmatpush1.bf16.msra.mxu0 %v163
    %215 = vmatprep.subr.bf16.mxu0 0
    %216 = vmatpush2.bf16.msra.mxu0 0
    %217 = vmatprep.subr.bf16.mxu0 0
    %218 = vmatpush2.bf16.msra.mxu0 0
    %219 = vmatprep.subr.bf16.mxu0 0
    %220 = vmatpush2.bf16.msra.mxu0 0
    %221 = vmatprep.subr.bf16.mxu0 0
    %222 = vmatpush2.bf16.msra.mxu0 0
    %223 = vmatprep.subr.bf16.mxu0 0
    %224 = vmatpush2.bf16.msra.mxu0 0
    %225 = vmatprep.subr.bf16.mxu0 0
    %226 = vmatpush2.bf16.msra.mxu0 0
    %227 = vmatprep.subr.bf16.mxu0 0
    %228 = vmatpush2.bf16.msra.mxu0 0
    %229 = vmatprep.subr.bf16.mxu0 0
    %230 = vmatpush2.bf16.msra.mxu0 0
    %231 = vmatprep.mubr.bf16.mxu0 0
    %232 = vmatmul.mubr.bf16.gmra.mxu0 %v197
    %v233 = vpop.f32.mrf.mxu0
    %v234 = vadd.f32 %v78, %v233
    %v235 = vpop.f32.mrf.mxu0
    %v236 = vadd.f32 %v82, %v235
    %v237 = vpop.f32.mrf.mxu0
    %v238 = vpop.f32.mrf.mxu0
    %239 = vdwg.mxu0
    %240 = vmatprep.subr.bf16.mxu0 0
    %241 = vmatpush1.bf16.msra.mxu0 0
    %242 = vmatprep.subr.bf16.mxu0 0
    %243 = vmatpush1.bf16.msra.mxu0 0
    %244 = vmatprep.subr.bf16.mxu0 0
    %245 = vmatpush1.bf16.msra.mxu0 0
    %246 = vmatprep.subr.bf16.mxu0 0
    %247 = vmatpush1.bf16.msra.mxu0 0
    %248 = vmatprep.subr.bf16.mxu0 0
    %249 = vmatpush1.bf16.msra.mxu0 0
    %250 = vmatprep.subr.bf16.mxu0 0
    %251 = vmatpush1.bf16.msra.mxu0 0
    %252 = vmatprep.subr.bf16.mxu0 %v174
    %253 = vmatpush1.bf16.msra.mxu0 %v173
    %254 = vmatprep.subr.bf16.mxu0 %v166
    %255 = vmatpush1.bf16.msra.mxu0 %v165
    %256 = vmatprep.subr.bf16.mxu0 0
    %257 = vmatpush2.bf16.msra.mxu0 0
    %258 = vmatprep.subr.bf16.mxu0 0
    %259 = vmatpush2.bf16.msra.mxu0 0
    %260 = vmatprep.subr.bf16.mxu0 0
    %261 = vmatpush2.bf16.msra.mxu0 0
    %262 = vmatprep.subr.bf16.mxu0 0
    %263 = vmatpush2.bf16.msra.mxu0 0
    %264 = vmatprep.subr.bf16.mxu0 0
    %265 = vmatpush2.bf16.msra.mxu0 0
    %266 = vmatprep.subr.bf16.mxu0 0
    %267 = vmatpush2.bf16.msra.mxu0 0
    %268 = vmatprep.subr.bf16.mxu0 0
    %269 = vmatpush2.bf16.msra.mxu0 0
    %270 = vmatprep.subr.bf16.mxu0 0
    %271 = vmatpush2.bf16.msra.mxu0 0
    %272 = vmatprep.mubr.bf16.mxu0 0
    %273 = vmatmul.mubr.bf16.gmra.mxu0 %v197
    %v274 = vpop.f32.mrf.mxu0
    %v275 = vadd.f32 %v86, %v274
    %v276 = vpop.f32.mrf.mxu0
    %v277 = vadd.f32 %v90, %v276
    %v278 = vpop.f32.mrf.mxu0
    %v279 = vpop.f32.mrf.mxu0
    %280 = vdwg.mxu0
    %281 = vmatprep.subr.bf16.mxu0 0
    %282 = vmatpush1.bf16.msra.mxu0 0
    %283 = vmatprep.subr.bf16.mxu0 0
    %284 = vmatpush1.bf16.msra.mxu0 0
    %285 = vmatprep.subr.bf16.mxu0 0
    %286 = vmatpush1.bf16.msra.mxu0 0
    %287 = vmatprep.subr.bf16.mxu0 0
    %288 = vmatpush1.bf16.msra.mxu0 0
    %289 = vmatprep.subr.bf16.mxu0 0
    %290 = vmatpush1.bf16.msra.mxu0 0
    %291 = vmatprep.subr.bf16.mxu0 0
    %292 = vmatpush1.bf16.msra.mxu0 0
    %293 = vmatprep.subr.bf16.mxu0 %v176
    %294 = vmatpush1.bf16.msra.mxu0 %v175
    %295 = vmatprep.subr.bf16.mxu0 %v168
    %296 = vmatpush1.bf16.msra.mxu0 %v167
    %297 = vmatprep.subr.bf16.mxu0 0
    %298 = vmatpush2.bf16.msra.mxu0 0
    %299 = vmatprep.subr.bf16.mxu0 0
    %300 = vmatpush2.bf16.msra.mxu0 0
    %301 = vmatprep.subr.bf16.mxu0 0
    %302 = vmatpush2.bf16.msra.mxu0 0
    %303 = vmatprep.subr.bf16.mxu0 0
    %304 = vmatpush2.bf16.msra.mxu0 0
    %305 = vmatprep.subr.bf16.mxu0 0
    %306 = vmatpush2.bf16.msra.mxu0 0
    %307 = vmatprep.subr.bf16.mxu0 0
    %308 = vmatpush2.bf16.msra.mxu0 0
    %309 = vmatprep.subr.bf16.mxu0 0
    %310 = vmatpush2.bf16.msra.mxu0 0
    %311 = vmatprep.subr.bf16.mxu0 0
    %312 = vmatpush2.bf16.msra.mxu0 0
    %313 = vmatprep.mubr.bf16.mxu0 0
    %314 = vmatmul.mubr.bf16.gmra.mxu0 %v197
    %v315 = vpop.f32.mrf.mxu0
    %v316 = vadd.f32 %v94, %v315
    %v317 = vpop.f32.mrf.mxu0
    %v318 = vadd.f32 %v98, %v317
    %v319 = vpop.f32.mrf.mxu0
    %v320 = vpop.f32.mrf.mxu0
    %321 = vdwg.mxu0
    %322 = vmatprep.subr.bf16.mxu0 0
    %323 = vmatpush1.bf16.msra.mxu0 0
    %324 = vmatprep.subr.bf16.mxu0 0
    %325 = vmatpush1.bf16.msra.mxu0 0
    %326 = vmatprep.subr.bf16.mxu0 0
    %327 = vmatpush1.bf16.msra.mxu0 0
    %328 = vmatprep.subr.bf16.mxu0 0
    %329 = vmatpush1.bf16.msra.mxu0 0
    %330 = vmatprep.subr.bf16.mxu0 0
    %331 = vmatpush1.bf16.msra.mxu0 0
    %332 = vmatprep.subr.bf16.mxu0 0
    %333 = vmatpush1.bf16.msra.mxu0 0
    %334 = vmatprep.subr.bf16.mxu0 %v178
    %335 = vmatpush1.bf16.msra.mxu0 %v177
    %336 = vmatprep.subr.bf16.mxu0 %v170
    %337 = vmatpush1.bf16.msra.mxu0 %v169
    %338 = vmatprep.subr.bf16.mxu0 0
    %339 = vmatpush2.bf16.msra.mxu0 0
    %340 = vmatprep.subr.bf16.mxu0 0
    %341 = vmatpush2.bf16.msra.mxu0 0
    %342 = vmatprep.subr.bf16.mxu0 0
    %343 = vmatpush2.bf16.msra.mxu0 0
    %344 = vmatprep.subr.bf16.mxu0 0
    %345 = vmatpush2.bf16.msra.mxu0 0
    %346 = vmatprep.subr.bf16.mxu0 0
    %347 = vmatpush2.bf16.msra.mxu0 0
    %348 = vmatprep.subr.bf16.mxu0 0
    %349 = vmatpush2.bf16.msra.mxu0 0
    %350 = vmatprep.subr.bf16.mxu0 0
    %351 = vmatpush2.bf16.msra.mxu0 0
    %352 = vmatprep.subr.bf16.mxu0 0
    %353 = vmatpush2.bf16.msra.mxu0 0
    %354 = vmatprep.mubr.bf16.mxu0 0
    %355 = vmatmul.mubr.bf16.gmra.mxu0 %v197
    %v356 = vpop.f32.mrf.mxu0
    %v357 = vadd.f32 %v102, %v356
    %v358 = vpop.f32.mrf.mxu0
    %v359 = vadd.f32 %v106, %v358
    %v360 = vpop.f32.mrf.mxu0
    %v361 = vpop.f32.mrf.mxu0
    %362 = vdwg.mxu0
    %v363 = vmax.f32 %v234, 0.0
    %v364 = vmax.f32 %v236, 0.0
    %v365 = vmax.f32 %v275, 0.0
    %v366 = vmax.f32 %v277, 0.0
    %v367 = vmax.f32 %v316, 0.0
    %v368 = vmax.f32 %v318, 0.0
    %v369 = vmax.f32 %v357, 0.0
    %v370 = vmax.f32 %v359, 0.0
    %v371 = vpack.c.bf16 %v363, %v363
    %v372 = vpack.c.bf16 %v364, %v364
    %v373 = vpack.c.bf16 %v365, %v365
    %v374 = vpack.c.bf16 %v366, %v366
    %v375 = vpack.c.bf16 %v367, %v367
    %v376 = vpack.c.bf16 %v368, %v368
    %v377 = vpack.c.bf16 %v369, %v369
    %v378 = vpack.c.bf16 %v370, %v370
    %v379 = vld [vmem:[#allocation5] sm:$0xf]
    %v380 = vld [vmem:[#allocation5 + $0x4] sm:$0xf]
    %v381 = vld [vmem:[#allocation5 + $0x8] sm:$0xf]
    %v382 = vld [vmem:[#allocation5 + $0xc] sm:$0xf]
    %v383 = vld [vmem:[#allocation5 + $0x10] sm:$0xf]
    %v384 = vld [vmem:[#allocation5 + $0x14] sm:$0xf]
    %v385 = vld [vmem:[#allocation5 + $0x18] sm:$0xf]
    %v386 = vld [vmem:[#allocation5 + $0x1c] sm:$0xf]
    %v387 = vld [vmem:[#allocation5 + $0x20] sm:$0xf]
    %v388 = vld [vmem:[#allocation5 + $0x24] sm:$0xf]
    %v389 = vld [vmem:[#allocation5 + $0x28] sm:$0xf]
    %v390 = vld [vmem:[#allocation5 + $0x2c] sm:$0xf]
    %v391 = vld [vmem:[#allocation5 + $0x30] sm:$0xf]
    %v392 = vld [vmem:[#allocation5 + $0x34] sm:$0xf]
    %v393 = vld [vmem:[#allocation5 + $0x38] sm:$0xf]
    %v394 = vld [vmem:[#allocation5 + $0x3c] sm:$0xf]
    %v395 = vld [vmem:[#allocation5 + $0x40] sm:$0xf]
    %v396 = vld [vmem:[#allocation5 + $0x44] sm:$0xf]
    %v397 = vld [vmem:[#allocation5 + $0x48] sm:$0xf]
    %v398 = vld [vmem:[#allocation5 + $0x4c] sm:$0xf]
    %v399 = vld [vmem:[#allocation5 + $0x50] sm:$0xf]
    %v400 = vld [vmem:[#allocation5 + $0x54] sm:$0xf]
    %v401 = vld [vmem:[#allocation5 + $0x58] sm:$0xf]
    %v402 = vld [vmem:[#allocation5 + $0x5c] sm:$0xf]
    %v403 = vld [vmem:[#allocation5 + $0x60] sm:$0xf]
    %v404 = vld [vmem:[#allocation5 + $0x64] sm:$0xf]
    %v405 = vld [vmem:[#allocation5 + $0x68] sm:$0xf]
    %v406 = vld [vmem:[#allocation5 + $0x6c] sm:$0xf]
    %v407 = vld [vmem:[#allocation5 + $0x70] sm:$0xf]
    %v408 = vld [vmem:[#allocation5 + $0x74] sm:$0xf]
    %v409 = vld [vmem:[#allocation5 + $0x78] sm:$0xf]
    %v410 = vld [vmem:[#allocation5 + $0x7c] sm:$0xf]
    %v411 = vld [vmem:[#allocation5 + $0x80] sm:$0xf]
    %v412 = vld [vmem:[#allocation5 + $0x84] sm:$0xf]
    %v413 = vld [vmem:[#allocation5 + $0x88] sm:$0xf]
    %v414 = vld [vmem:[#allocation5 + $0x8c] sm:$0xf]
    %v415 = vld [vmem:[#allocation5 + $0x90] sm:$0xf]
    %v416 = vld [vmem:[#allocation5 + $0x94] sm:$0xf]
    %v417 = vld [vmem:[#allocation5 + $0x98] sm:$0xf]
    %v418 = vld [vmem:[#allocation5 + $0x9c] sm:$0xf]
    %v419 = vld [vmem:[#allocation5 + $0xa0] sm:$0xf]
    %v420 = vld [vmem:[#allocation5 + $0xa4] sm:$0xf]
    %v421 = vld [vmem:[#allocation5 + $0xa8] sm:$0xf]
    %v422 = vld [vmem:[#allocation5 + $0xac] sm:$0xf]
    %v423 = vld [vmem:[#allocation5 + $0xb0] sm:$0xf]
    %v424 = vld [vmem:[#allocation5 + $0xb4] sm:$0xf]
    %v425 = vld [vmem:[#allocation5 + $0xb8] sm:$0xf]
    %v426 = vld [vmem:[#allocation5 + $0xbc] sm:$0xf]
    %v427 = vld [vmem:[#allocation5 + $0xc0] sm:$0xf]
    %v428 = vld [vmem:[#allocation5 + $0xc4] sm:$0xf]
    %v429 = vld [vmem:[#allocation5 + $0xc8] sm:$0xf]
    %v430 = vld [vmem:[#allocation5 + $0xcc] sm:$0xf]
    %v431 = vld [vmem:[#allocation5 + $0xd0] sm:$0xf]
    %v432 = vld [vmem:[#allocation5 + $0xd4] sm:$0xf]
    %v433 = vld [vmem:[#allocation5 + $0xd8] sm:$0xf]
    %v434 = vld [vmem:[#allocation5 + $0xdc] sm:$0xf]
    %v435 = vld [vmem:[#allocation5 + $0xe0] sm:$0xf]
    %v436 = vld [vmem:[#allocation5 + $0xe4] sm:$0xf]
    %v437 = vld [vmem:[#allocation5 + $0xe8] sm:$0xf]
    %v438 = vld [vmem:[#allocation5 + $0xec] sm:$0xf]
    %v439 = vld [vmem:[#allocation5 + $0xf0] sm:$0xf]
    %v440 = vld [vmem:[#allocation5 + $0xf4] sm:$0xf]
    %v441 = vld [vmem:[#allocation5 + $0xf8] sm:$0xf]
    %v442 = vld [vmem:[#allocation5 + $0xfc] sm:$0xf]
    %v443 = vld [vmem:[#allocation5 + $0x100] sm:$0xf]
    %v444 = vld [vmem:[#allocation5 + $0x104] sm:$0xf]
    %v445 = vld [vmem:[#allocation5 + $0x108] sm:$0xf]
    %v446 = vld [vmem:[#allocation5 + $0x10c] sm:$0xf]
    %v447 = vld [vmem:[#allocation5 + $0x110] sm:$0xf]
    %v448 = vld [vmem:[#allocation5 + $0x114] sm:$0xf]
    %v449 = vld [vmem:[#allocation5 + $0x118] sm:$0xf]
    %v450 = vld [vmem:[#allocation5 + $0x11c] sm:$0xf]
    %v451 = vld [vmem:[#allocation5 + $0x120] sm:$0xf]
    %v452 = vld [vmem:[#allocation5 + $0x124] sm:$0xf]
    %v453 = vld [vmem:[#allocation5 + $0x128] sm:$0xf]
    %v454 = vld [vmem:[#allocation5 + $0x12c] sm:$0xf]
    %v455 = vld [vmem:[#allocation5 + $0x130] sm:$0xf]
    %v456 = vld [vmem:[#allocation5 + $0x134] sm:$0xf]
    %v457 = vld [vmem:[#allocation5 + $0x138] sm:$0xf]
    %v458 = vld [vmem:[#allocation5 + $0x13c] sm:$0xf]
    %v459 = vld [vmem:[#allocation5 + $0x140] sm:$0xf]
    %v460 = vld [vmem:[#allocation5 + $0x144] sm:$0xf]
    %v461 = vld [vmem:[#allocation5 + $0x148] sm:$0xf]
    %v462 = vld [vmem:[#allocation5 + $0x14c] sm:$0xf]
    %v463 = vld [vmem:[#allocation5 + $0x150] sm:$0xf]
    %v464 = vld [vmem:[#allocation5 + $0x154] sm:$0xf]
    %v465 = vld [vmem:[#allocation5 + $0x158] sm:$0xf]
    %v466 = vld [vmem:[#allocation5 + $0x15c] sm:$0xf]
    %v467 = vld [vmem:[#allocation5 + $0x160] sm:$0xf]
    %v468 = vld [vmem:[#allocation5 + $0x164] sm:$0xf]
    %v469 = vld [vmem:[#allocation5 + $0x168] sm:$0xf]
    %v470 = vld [vmem:[#allocation5 + $0x16c] sm:$0xf]
    %v471 = vld [vmem:[#allocation5 + $0x170] sm:$0xf]
    %v472 = vld [vmem:[#allocation5 + $0x174] sm:$0xf]
    %v473 = vld [vmem:[#allocation5 + $0x178] sm:$0xf]
    %v474 = vld [vmem:[#allocation5 + $0x17c] sm:$0xf]
    %v475 = vld [vmem:[#allocation5 + $0x180] sm:$0xf]
    %v476 = vld [vmem:[#allocation5 + $0x184] sm:$0xf]
    %v477 = vld [vmem:[#allocation5 + $0x188] sm:$0xf]
    %v478 = vld [vmem:[#allocation5 + $0x18c] sm:$0xf]
    %v479 = vld [vmem:[#allocation5 + $0x190] sm:$0xf]
    %v480 = vld [vmem:[#allocation5 + $0x194] sm:$0xf]
    %v481 = vld [vmem:[#allocation5 + $0x198] sm:$0xf]
    %v482 = vld [vmem:[#allocation5 + $0x19c] sm:$0xf]
    %v483 = vld [vmem:[#allocation5 + $0x1a0] sm:$0xf]
    %v484 = vld [vmem:[#allocation5 + $0x1a4] sm:$0xf]
    %v485 = vld [vmem:[#allocation5 + $0x1a8] sm:$0xf]
    %v486 = vld [vmem:[#allocation5 + $0x1ac] sm:$0xf]
    %v487 = vld [vmem:[#allocation5 + $0x1b0] sm:$0xf]
    %v488 = vld [vmem:[#allocation5 + $0x1b4] sm:$0xf]
    %v489 = vld [vmem:[#allocation5 + $0x1b8] sm:$0xf]
    %v490 = vld [vmem:[#allocation5 + $0x1bc] sm:$0xf]
    %v491 = vld [vmem:[#allocation5 + $0x1c0] sm:$0xf]
    %v492 = vld [vmem:[#allocation5 + $0x1c4] sm:$0xf]
    %v493 = vld [vmem:[#allocation5 + $0x1c8] sm:$0xf]
    %v494 = vld [vmem:[#allocation5 + $0x1cc] sm:$0xf]
    %v495 = vld [vmem:[#allocation5 + $0x1d0] sm:$0xf]
    %v496 = vld [vmem:[#allocation5 + $0x1d4] sm:$0xf]
    %v497 = vld [vmem:[#allocation5 + $0x1d8] sm:$0xf]
    %v498 = vld [vmem:[#allocation5 + $0x1dc] sm:$0xf]
    %v499 = vld [vmem:[#allocation5 + $0x1e0] sm:$0xf]
    %v500 = vld [vmem:[#allocation5 + $0x1e4] sm:$0xf]
    %v501 = vld [vmem:[#allocation5 + $0x1e8] sm:$0xf]
    %v502 = vld [vmem:[#allocation5 + $0x1ec] sm:$0xf]
    %v503 = vld [vmem:[#allocation5 + $0x1f0] sm:$0xf]
    %v504 = vld [vmem:[#allocation5 + $0x1f4] sm:$0xf]
    %v505 = vld [vmem:[#allocation5 + $0x1f8] sm:$0xf]
    %v506 = vld [vmem:[#allocation5 + $0x1fc] sm:$0xf]
    %v507 = vld [vmem:[%s4] sm:$0x1]
    %v509 = vlaneseq
    %v510 = vshrl.u32 %v509, 7
    %v511 = vsub.s32 0, %v510
    %v512 = vrot.slane %v507, %v511
    %v642 = vunpack.c.l.b16 %v379
    %v643 = vunpack.c.l.b16 %v380
    %v644 = vunpack.c.l.b16 %v381
    %v645 = vunpack.c.l.b16 %v382
    %v646 = vunpack.c.l.b16 %v383
    %v647 = vunpack.c.l.b16 %v384
    %v648 = vunpack.c.l.b16 %v385
    %v649 = vunpack.c.l.b16 %v386
    %v650 = vunpack.c.l.b16 %v387
    %v651 = vunpack.c.l.b16 %v388
    %v652 = vunpack.c.l.b16 %v389
    %v653 = vunpack.c.l.b16 %v390
    %v654 = vunpack.c.l.b16 %v391
    %v655 = vunpack.c.l.b16 %v392
    %v656 = vunpack.c.l.b16 %v393
    %v657 = vunpack.c.l.b16 %v394
    %v658 = vunpack.c.l.b16 %v395
    %v659 = vunpack.c.l.b16 %v396
    %v660 = vunpack.c.l.b16 %v397
    %v661 = vunpack.c.l.b16 %v398
    %v662 = vunpack.c.l.b16 %v399
    %v663 = vunpack.c.l.b16 %v400
    %v664 = vunpack.c.l.b16 %v401
    %v665 = vunpack.c.l.b16 %v402
    %v666 = vunpack.c.l.b16 %v403
    %v667 = vunpack.c.l.b16 %v404
    %v668 = vunpack.c.l.b16 %v405
    %v669 = vunpack.c.l.b16 %v406
    %v670 = vunpack.c.l.b16 %v407
    %v671 = vunpack.c.l.b16 %v408
    %v672 = vunpack.c.l.b16 %v409
    %v673 = vunpack.c.l.b16 %v410
    %v674 = vunpack.c.l.b16 %v411
    %v675 = vunpack.c.l.b16 %v412
    %v676 = vunpack.c.l.b16 %v413
    %v677 = vunpack.c.l.b16 %v414
    %v678 = vunpack.c.l.b16 %v415
    %v679 = vunpack.c.l.b16 %v416
    %v680 = vunpack.c.l.b16 %v417
    %v681 = vunpack.c.l.b16 %v418
    %v682 = vunpack.c.l.b16 %v419
    %v683 = vunpack.c.l.b16 %v420
    %v684 = vunpack.c.l.b16 %v421
    %v685 = vunpack.c.l.b16 %v422
    %v686 = vunpack.c.l.b16 %v423
    %v687 = vunpack.c.l.b16 %v424
    %v688 = vunpack.c.l.b16 %v425
    %v689 = vunpack.c.l.b16 %v426
    %v690 = vunpack.c.l.b16 %v427
    %v691 = vunpack.c.l.b16 %v428
    %v692 = vunpack.c.l.b16 %v429
    %v693 = vunpack.c.l.b16 %v430
    %v694 = vunpack.c.l.b16 %v431
    %v695 = vunpack.c.l.b16 %v432
    %v696 = vunpack.c.l.b16 %v433
    %v697 = vunpack.c.l.b16 %v434
    %v698 = vunpack.c.l.b16 %v435
    %v699 = vunpack.c.l.b16 %v436
    %v700 = vunpack.c.l.b16 %v437
    %v701 = vunpack.c.l.b16 %v438
    %v702 = vunpack.c.l.b16 %v439
    %v703 = vunpack.c.l.b16 %v440
    %v704 = vunpack.c.l.b16 %v441
    %v705 = vunpack.c.l.b16 %v442
    %v706 = vunpack.c.l.b16 %v443
    %v707 = vunpack.c.l.b16 %v444
    %v708 = vunpack.c.l.b16 %v445
    %v709 = vunpack.c.l.b16 %v446
    %v710 = vunpack.c.l.b16 %v447
    %v711 = vunpack.c.l.b16 %v448
    %v712 = vunpack.c.l.b16 %v449
    %v713 = vunpack.c.l.b16 %v450
    %v714 = vunpack.c.l.b16 %v451
    %v715 = vunpack.c.l.b16 %v452
    %v716 = vunpack.c.l.b16 %v453
    %v717 = vunpack.c.l.b16 %v454
    %v718 = vunpack.c.l.b16 %v455
    %v719 = vunpack.c.l.b16 %v456
    %v720 = vunpack.c.l.b16 %v457
    %v721 = vunpack.c.l.b16 %v458
    %v722 = vunpack.c.l.b16 %v459
    %v723 = vunpack.c.l.b16 %v460
    %v724 = vunpack.c.l.b16 %v461
    %v725 = vunpack.c.l.b16 %v462
    %v726 = vunpack.c.l.b16 %v463
    %v727 = vunpack.c.l.b16 %v464
    %v728 = vunpack.c.l.b16 %v465
    %v729 = vunpack.c.l.b16 %v466
    %v730 = vunpack.c.l.b16 %v467
    %v731 = vunpack.c.l.b16 %v468
    %v732 = vunpack.c.l.b16 %v469
    %v733 = vunpack.c.l.b16 %v470
    %v734 = vunpack.c.l.b16 %v471
    %v735 = vunpack.c.l.b16 %v472
    %v736 = vunpack.c.l.b16 %v473
    %v737 = vunpack.c.l.b16 %v474
    %v738 = vunpack.c.l.b16 %v475
    %v739 = vunpack.c.l.b16 %v476
    %v740 = vunpack.c.l.b16 %v477
    %v741 = vunpack.c.l.b16 %v478
    %v742 = vunpack.c.l.b16 %v479
    %v743 = vunpack.c.l.b16 %v480
    %v744 = vunpack.c.l.b16 %v481
    %v745 = vunpack.c.l.b16 %v482
    %v746 = vunpack.c.l.b16 %v483
    %v747 = vunpack.c.l.b16 %v484
    %v748 = vunpack.c.l.b16 %v485
    %v749 = vunpack.c.l.b16 %v486
    %v750 = vunpack.c.l.b16 %v487
    %v751 = vunpack.c.l.b16 %v488
    %v752 = vunpack.c.l.b16 %v489
    %v753 = vunpack.c.l.b16 %v490
    %v754 = vunpack.c.l.b16 %v491
    %v755 = vunpack.c.l.b16 %v492
    %v756 = vunpack.c.l.b16 %v493
    %v757 = vunpack.c.l.b16 %v494
    %v758 = vunpack.c.l.b16 %v495
    %v759 = vunpack.c.l.b16 %v496
    %v760 = vunpack.c.l.b16 %v497
    %v761 = vunpack.c.l.b16 %v498
    %v762 = vunpack.c.l.b16 %v499
    %v763 = vunpack.c.l.b16 %v500
    %v764 = vunpack.c.l.b16 %v501
    %v765 = vunpack.c.l.b16 %v502
    %v766 = vunpack.c.l.b16 %v503
    %v767 = vunpack.c.l.b16 %v504
    %v768 = vunpack.c.l.b16 %v505
    %v769 = vunpack.c.l.b16 %v506
    %v770 = vpack.c.b16 %v643, %v642
    %v771 = vpack.c.b16 %v645, %v644
    %v772 = vpack.c.b16 %v647, %v646
    %v773 = vpack.c.b16 %v649, %v648
    %v774 = vpack.c.b16 %v651, %v650
    %v775 = vpack.c.b16 %v653, %v652
    %v776 = vpack.c.b16 %v655, %v654
    %v777 = vpack.c.b16 %v657, %v656
    %v778 = vpack.c.b16 %v659, %v658
    %v779 = vpack.c.b16 %v661, %v660
    %v780 = vpack.c.b16 %v663, %v662
    %v781 = vpack.c.b16 %v665, %v664
    %v782 = vpack.c.b16 %v667, %v666
    %v783 = vpack.c.b16 %v669, %v668
    %v784 = vpack.c.b16 %v671, %v670
    %v785 = vpack.c.b16 %v673, %v672
    %v786 = vpack.c.b16 %v675, %v674
    %v787 = vpack.c.b16 %v677, %v676
    %v788 = vpack.c.b16 %v679, %v678
    %v789 = vpack.c.b16 %v681, %v680
    %v790 = vpack.c.b16 %v683, %v682
    %v791 = vpack.c.b16 %v685, %v684
    %v792 = vpack.c.b16 %v687, %v686
    %v793 = vpack.c.b16 %v689, %v688
    %v794 = vpack.c.b16 %v691, %v690
    %v795 = vpack.c.b16 %v693, %v692
    %v796 = vpack.c.b16 %v695, %v694
    %v797 = vpack.c.b16 %v697, %v696
    %v798 = vpack.c.b16 %v699, %v698
    %v799 = vpack.c.b16 %v701, %v700
    %v800 = vpack.c.b16 %v703, %v702
    %v801 = vpack.c.b16 %v705, %v704
    %v802 = vpack.c.b16 %v707, %v706
    %v803 = vpack.c.b16 %v709, %v708
    %v804 = vpack.c.b16 %v711, %v710
    %v805 = vpack.c.b16 %v713, %v712
    %v806 = vpack.c.b16 %v715, %v714
    %v807 = vpack.c.b16 %v717, %v716
    %v808 = vpack.c.b16 %v719, %v718
    %v809 = vpack.c.b16 %v721, %v720
    %v810 = vpack.c.b16 %v723, %v722
    %v811 = vpack.c.b16 %v725, %v724
    %v812 = vpack.c.b16 %v727, %v726
    %v813 = vpack.c.b16 %v729, %v728
    %v814 = vpack.c.b16 %v731, %v730
    %v815 = vpack.c.b16 %v733, %v732
    %v816 = vpack.c.b16 %v735, %v734
    %v817 = vpack.c.b16 %v737, %v736
    %v818 = vpack.c.b16 %v739, %v738
    %v819 = vpack.c.b16 %v741, %v740
    %v820 = vpack.c.b16 %v743, %v742
    %v821 = vpack.c.b16 %v745, %v744
    %v822 = vpack.c.b16 %v747, %v746
    %v823 = vpack.c.b16 %v749, %v748
    %v824 = vpack.c.b16 %v751, %v750
    %v825 = vpack.c.b16 %v753, %v752
    %v826 = vpack.c.b16 %v755, %v754
    %v827 = vpack.c.b16 %v757, %v756
    %v828 = vpack.c.b16 %v759, %v758
    %v829 = vpack.c.b16 %v761, %v760
    %v830 = vpack.c.b16 %v763, %v762
    %v831 = vpack.c.b16 %v765, %v764
    %v832 = vpack.c.b16 %v767, %v766
    %v833 = vpack.c.b16 %v769, %v768
    %898 = vmatprep.subr.bf16.mxu0 0
    %899 = vmatpush1.bf16.msra.mxu0 %v777
    %900 = vmatprep.subr.bf16.mxu0 0
    %901 = vmatpush1.bf16.msra.mxu0 %v776
    %902 = vmatprep.subr.bf16.mxu0 0
    %903 = vmatpush1.bf16.msra.mxu0 %v775
    %904 = vmatprep.subr.bf16.mxu0 0
    %905 = vmatpush1.bf16.msra.mxu0 %v774
    %906 = vmatprep.subr.bf16.mxu0 0
    %907 = vmatpush1.bf16.msra.mxu0 %v773
    %908 = vmatprep.subr.bf16.mxu0 0
    %909 = vmatpush1.bf16.msra.mxu0 %v772
    %910 = vmatprep.subr.bf16.mxu0 0
    %911 = vmatpush1.bf16.msra.mxu0 %v771
    %912 = vmatprep.subr.bf16.mxu0 0
    %913 = vmatpush1.bf16.msra.mxu0 %v770
    %914 = vmatprep.subr.bf16.mxu0 0
    %915 = vmatpush2.bf16.msra.mxu0 %v785
    %916 = vmatprep.subr.bf16.mxu0 0
    %917 = vmatpush2.bf16.msra.mxu0 %v784
    %918 = vmatprep.subr.bf16.mxu0 0
    %919 = vmatpush2.bf16.msra.mxu0 %v783
    %920 = vmatprep.subr.bf16.mxu0 0
    %921 = vmatpush2.bf16.msra.mxu0 %v782
    %922 = vmatprep.subr.bf16.mxu0 0
    %923 = vmatpush2.bf16.msra.mxu0 %v781
    %924 = vmatprep.subr.bf16.mxu0 0
    %925 = vmatpush2.bf16.msra.mxu0 %v780
    %926 = vmatprep.subr.bf16.mxu0 0
    %927 = vmatpush2.bf16.msra.mxu0 %v779
    %928 = vmatprep.subr.bf16.mxu0 0
    %929 = vmatpush2.bf16.msra.mxu0 %v778
    %930 = vmatprep.mubr.bf16.mxu0 %v372
    %931 = vmatmul.mubr.bf16.gmra.mxu0 %v371
    %v932 = vpop.f32.mrf.mxu0
    %v933 = vadd.f32 %v512, %v932
    %v934 = vpop.f32.mrf.mxu0
    %v935 = vpop.f32.mrf.mxu0
    %v936 = vpop.f32.mrf.mxu0
    %937 = vdwg.mxu0
    %938 = vmatprep.subr.bf16.mxu0 0
    %939 = vmatpush1.bf16.msra.mxu0 %v793
    %940 = vmatprep.subr.bf16.mxu0 0
    %941 = vmatpush1.bf16.msra.mxu0 %v792
    %942 = vmatprep.subr.bf16.mxu0 0
    %943 = vmatpush1.bf16.msra.mxu0 %v791
    %944 = vmatprep.subr.bf16.mxu0 0
    %945 = vmatpush1.bf16.msra.mxu0 %v790
    %946 = vmatprep.subr.bf16.mxu0 0
    %947 = vmatpush1.bf16.msra.mxu0 %v789
    %948 = vmatprep.subr.bf16.mxu0 0
    %949 = vmatpush1.bf16.msra.mxu0 %v788
    %950 = vmatprep.subr.bf16.mxu0 0
    %951 = vmatpush1.bf16.msra.mxu0 %v787
    %952 = vmatprep.subr.bf16.mxu0 0
    %953 = vmatpush1.bf16.msra.mxu0 %v786
    %954 = vmatprep.subr.bf16.mxu0 0
    %955 = vmatpush2.bf16.msra.mxu0 %v801
    %956 = vmatprep.subr.bf16.mxu0 0
    %957 = vmatpush2.bf16.msra.mxu0 %v800
    %958 = vmatprep.subr.bf16.mxu0 0
    %959 = vmatpush2.bf16.msra.mxu0 %v799
    %960 = vmatprep.subr.bf16.mxu0 0
    %961 = vmatpush2.bf16.msra.mxu0 %v798
    %962 = vmatprep.subr.bf16.mxu0 0
    %963 = vmatpush2.bf16.msra.mxu0 %v797
    %964 = vmatprep.subr.bf16.mxu0 0
    %965 = vmatpush2.bf16.msra.mxu0 %v796
    %966 = vmatprep.subr.bf16.mxu0 0
    %967 = vmatpush2.bf16.msra.mxu0 %v795
    %968 = vmatprep.subr.bf16.mxu0 0
    %969 = vmatpush2.bf16.msra.mxu0 %v794
    %970 = vmatprep.mubr.bf16.mxu0 %v374
    %971 = vmatmul.mubr.bf16.gmra.mxu0 %v373
    %v972 = vpop.f32.mrf.mxu0
    %v973 = vadd.f32 %v933, %v972
    %v974 = vpop.f32.mrf.mxu0
    %v975 = vpop.f32.mrf.mxu0
    %v976 = vpop.f32.mrf.mxu0
    %977 = vdwg.mxu0
    %978 = vmatprep.subr.bf16.mxu0 0
    %979 = vmatpush1.bf16.msra.mxu0 %v809
    %980 = vmatprep.subr.bf16.mxu0 0
    %981 = vmatpush1.bf16.msra.mxu0 %v808
    %982 = vmatprep.subr.bf16.mxu0 0
    %983 = vmatpush1.bf16.msra.mxu0 %v807
    %984 = vmatprep.subr.bf16.mxu0 0
    %985 = vmatpush1.bf16.msra.mxu0 %v806
    %986 = vmatprep.subr.bf16.mxu0 0
    %987 = vmatpush1.bf16.msra.mxu0 %v805
    %988 = vmatprep.subr.bf16.mxu0 0
    %989 = vmatpush1.bf16.msra.mxu0 %v804
    %990 = vmatprep.subr.bf16.mxu0 0
    %991 = vmatpush1.bf16.msra.mxu0 %v803
    %992 = vmatprep.subr.bf16.mxu0 0
    %993 = vmatpush1.bf16.msra.mxu0 %v802
    %994 = vmatprep.subr.bf16.mxu0 0
    %995 = vmatpush2.bf16.msra.mxu0 %v817
    %996 = vmatprep.subr.bf16.mxu0 0
    %997 = vmatpush2.bf16.msra.mxu0 %v816
    %998 = vmatprep.subr.bf16.mxu0 0
    %999 = vmatpush2.bf16.msra.mxu0 %v815
    %1000 = vmatprep.subr.bf16.mxu0 0
    %1001 = vmatpush2.bf16.msra.mxu0 %v814
    %1002 = vmatprep.subr.bf16.mxu0 0
    %1003 = vmatpush2.bf16.msra.mxu0 %v813
    %1004 = vmatprep.subr.bf16.mxu0 0
    %1005 = vmatpush2.bf16.msra.mxu0 %v812
    %1006 = vmatprep.subr.bf16.mxu0 0
    %1007 = vmatpush2.bf16.msra.mxu0 %v811
    %1008 = vmatprep.subr.bf16.mxu0 0
    %1009 = vmatpush2.bf16.msra.mxu0 %v810
    %1010 = vmatprep.mubr.bf16.mxu0 %v376
    %1011 = vmatmul.mubr.bf16.gmra.mxu0 %v375
    %v1012 = vpop.f32.mrf.mxu0
    %v1013 = vadd.f32 %v973, %v1012
    %v1014 = vpop.f32.mrf.mxu0
    %v1015 = vpop.f32.mrf.mxu0
    %v1016 = vpop.f32.mrf.mxu0
    %1017 = vdwg.mxu0
    %1018 = vmatprep.subr.bf16.mxu0 0
    %1019 = vmatpush1.bf16.msra.mxu0 %v825
    %1020 = vmatprep.subr.bf16.mxu0 0
    %1021 = vmatpush1.bf16.msra.mxu0 %v824
    %1022 = vmatprep.subr.bf16.mxu0 0
    %1023 = vmatpush1.bf16.msra.mxu0 %v823
    %1024 = vmatprep.subr.bf16.mxu0 0
    %1025 = vmatpush1.bf16.msra.mxu0 %v822
    %1026 = vmatprep.subr.bf16.mxu0 0
    %1027 = vmatpush1.bf16.msra.mxu0 %v821
    %1028 = vmatprep.subr.bf16.mxu0 0
    %1029 = vmatpush1.bf16.msra.mxu0 %v820
    %1030 = vmatprep.subr.bf16.mxu0 0
    %1031 = vmatpush1.bf16.msra.mxu0 %v819
    %1032 = vmatprep.subr.bf16.mxu0 0
    %1033 = vmatpush1.bf16.msra.mxu0 %v818
    %1034 = vmatprep.subr.bf16.mxu0 0
    %1035 = vmatpush2.bf16.msra.mxu0 %v833
    %1036 = vmatprep.subr.bf16.mxu0 0
    %1037 = vmatpush2.bf16.msra.mxu0 %v832
    %1038 = vmatprep.subr.bf16.mxu0 0
    %1039 = vmatpush2.bf16.msra.mxu0 %v831
    %1040 = vmatprep.subr.bf16.mxu0 0
    %1041 = vmatpush2.bf16.msra.mxu0 %v830
    %1042 = vmatprep.subr.bf16.mxu0 0
    %1043 = vmatpush2.bf16.msra.mxu0 %v829
    %1044 = vmatprep.subr.bf16.mxu0 0
    %1045 = vmatpush2.bf16.msra.mxu0 %v828
    %1046 = vmatprep.subr.bf16.mxu0 0
    %1047 = vmatpush2.bf16.msra.mxu0 %v827
    %1048 = vmatprep.subr.bf16.mxu0 0
    %1049 = vmatpush2.bf16.msra.mxu0 %v826
    %1050 = vmatprep.mubr.bf16.mxu0 %v378
    %1051 = vmatmul.mubr.bf16.gmra.mxu0 %v377
    %v1052 = vpop.f32.mrf.mxu0
    %v1053 = vadd.f32 %v1013, %v1052
    %v1054 = vpop.f32.mrf.mxu0
    %v1055 = vpop.f32.mrf.mxu0
    %v1056 = vpop.f32.mrf.mxu0
    %1057 = vdwg.mxu0
    %v1058 = vmax.f32 %v1053, 0.0
    %v1059 = vpack.c.bf16 %v1058, %v1058
    %v1060 = vld [vmem:[%s5] sm:$0xf]
    %v1061 = vld [vmem:[%s5 + $0x4] sm:$0xf]
    %v1062 = vld [vmem:[%s5 + $0x8] sm:$0xf]
    %v1063 = vld [vmem:[%s5 + $0xc] sm:$0xf]
    %v1064 = vld [vmem:[%s5 + $0x10] sm:$0xf]
    %v1065 = vld [vmem:[%s5 + $0x14] sm:$0xf]
    %v1066 = vld [vmem:[%s5 + $0x18] sm:$0xf]
    %v1067 = vld [vmem:[%s5 + $0x1c] sm:$0xf]
    %v1068 = vld [vmem:[%s5 + $0x20] sm:$0xf]
    %v1069 = vld [vmem:[%s5 + $0x24] sm:$0xf]
    %v1070 = vld [vmem:[%s5 + $0x28] sm:$0xf]
    %v1071 = vld [vmem:[%s5 + $0x2c] sm:$0xf]
    %v1072 = vld [vmem:[%s5 + $0x30] sm:$0xf]
    %v1073 = vld [vmem:[%s5 + $0x34] sm:$0xf]
    %v1074 = vld [vmem:[%s5 + $0x38] sm:$0xf]
    %v1075 = vld [vmem:[%s5 + $0x3c] sm:$0xf]
    %v1076 = vld [vmem:[%s6] sm:$0x1]
    %v1078 = vlaneseq
    %v1079 = vshrl.u32 %v1078, 7
    %v1080 = vsub.s32 0, %v1079
    %v1081 = vrot.slane %v1076, %v1080
    %v1099 = vunpack.c.l.b16 %v1060
    %v1100 = vunpack.c.l.b16 %v1061
    %v1101 = vunpack.c.l.b16 %v1062
    %v1102 = vunpack.c.l.b16 %v1063
    %v1103 = vunpack.c.l.b16 %v1064
    %v1104 = vunpack.c.l.b16 %v1065
    %v1105 = vunpack.c.l.b16 %v1066
    %v1106 = vunpack.c.l.b16 %v1067
    %v1107 = vunpack.c.l.b16 %v1068
    %v1108 = vunpack.c.l.b16 %v1069
    %v1109 = vunpack.c.l.b16 %v1070
    %v1110 = vunpack.c.l.b16 %v1071
    %v1111 = vunpack.c.l.b16 %v1072
    %v1112 = vunpack.c.l.b16 %v1073
    %v1113 = vunpack.c.l.b16 %v1074
    %v1114 = vunpack.c.l.b16 %v1075
    %v1115 = vpack.c.b16 %v1100, %v1099
    %v1116 = vpack.c.b16 %v1102, %v1101
    %v1117 = vpack.c.b16 %v1104, %v1103
    %v1118 = vpack.c.b16 %v1106, %v1105
    %v1119 = vpack.c.b16 %v1108, %v1107
    %v1120 = vpack.c.b16 %v1110, %v1109
    %v1121 = vpack.c.b16 %v1112, %v1111
    %v1122 = vpack.c.b16 %v1114, %v1113
    %1131 = vmatprep.subr.bf16.mxu0 0
    %1132 = vmatpush1.bf16.msra.mxu0 %v1122
    %1133 = vmatprep.subr.bf16.mxu0 0
    %1134 = vmatpush1.bf16.msra.mxu0 %v1121
    %1135 = vmatprep.subr.bf16.mxu0 0
    %1136 = vmatpush1.bf16.msra.mxu0 %v1120
    %1137 = vmatprep.subr.bf16.mxu0 0
    %1138 = vmatpush1.bf16.msra.mxu0 %v1119
    %1139 = vmatprep.subr.bf16.mxu0 0
    %1140 = vmatpush1.bf16.msra.mxu0 %v1118
    %1141 = vmatprep.subr.bf16.mxu0 0
    %1142 = vmatpush1.bf16.msra.mxu0 %v1117
    %1143 = vmatprep.subr.bf16.mxu0 0
    %1144 = vmatpush1.bf16.msra.mxu0 %v1116
    %1145 = vmatprep.subr.bf16.mxu0 0
    %1146 = vmatpush1.bf16.msra.mxu0 %v1115
    %1147 = vmatprep.subr.bf16.mxu0 0
    %1148 = vmatpush2.bf16.msra.mxu0 0
    %1149 = vmatprep.subr.bf16.mxu0 0
    %1150 = vmatpush2.bf16.msra.mxu0 0
    %1151 = vmatprep.subr.bf16.mxu0 0
    %1152 = vmatpush2.bf16.msra.mxu0 0
    %1153 = vmatprep.subr.bf16.mxu0 0
    %1154 = vmatpush2.bf16.msra.mxu0 0
    %1155 = vmatprep.subr.bf16.mxu0 0
    %1156 = vmatpush2.bf16.msra.mxu0 0
    %1157 = vmatprep.subr.bf16.mxu0 0
    %1158 = vmatpush2.bf16.msra.mxu0 0
    %1159 = vmatprep.subr.bf16.mxu0 0
    %1160 = vmatpush2.bf16.msra.mxu0 0
    %1161 = vmatprep.subr.bf16.mxu0 0
    %1162 = vmatpush2.bf16.msra.mxu0 0
    %1163 = vmatprep.mubr.bf16.mxu0 0
    %1164 = vmatmul.mubr.bf16.gmra.mxu0 %v1059
    %v1165 = vpop.f32.mrf.mxu0
    %v1166 = vadd.f32 %v1081, %v1165
    %v1167 = vpop.f32.mrf.mxu0
    %v1168 = vpop.f32.mrf.mxu0
    %v1169 = vpop.f32.mrf.mxu0
    %1170 = vdwg.mxu0
    %vm1171 = vcmask 80896
    %v1172 = vsel %vm1171, %v1166, -inf
    %1173 = vmax.xlane.f32.xlu0 %v1172
    %v1174 = vpop.xlane.xlu0 %1173
    %v1175 = vsub.f32 %v1166, %v1174
    %v1176 = vmul.f32 %v1175, 1.442695
    %v1177 = vpow.pop %v1176
    %v1178 = vsel %vm1171, %v1177, 0.0
    %1179 = vadd.xlane.f32.xlu0 %v1178
    %v1180 = vpop.xlane.xlu0 %1179
    %v1181 = vlog2.pop %v1180
    %v1182 = vmul.f32 %v1181, 0.6931472
    %v1183 = vsub.f32 %v1175, %v1182
    %1184 = vst.msk [vmem:[#allocation7] sm:$0xff] %vm1171, %v1183
    // Predicated region
    $region38: #{net_forward.1} parent=1 // pred_check
      _
    $region39: #{net_forward.1} parent=1 // pred_check_branch
      %1186 = sbr.rel (0) target = $region41
    $region40: #{net_forward.1} parent=1 // pred_region
      %s1188 = ssub.s32 128, 128
      %1189 = vsyncadd [#allocation4], %s1188
      %s1191 = sshll.u32 [#allocation7], 4
      %s1192 = int_to_ptr.vmem [resolvable:$true] %s1191
      %1194 = dma.vmem_to_hbm [thread:$0]  %s1192, 128, %s7, [#allocation4]
    $region41: #{net_forward.1} parent=1 // pred_fallthru
      _
    // Predicated region
    $region42: #{net_forward.1} parent=1 // pred_check
      _
    $region43: #{net_forward.1} parent=1 // pred_check_branch
      %1196 = sbr.rel (0) target = $region45
    $region44: #{net_forward.1} parent=1 // pred_region
      %1197 = dma.done [#allocation4], 128
    $region45: #{net_forward.1} parent=1 // pred_fallthru
      _
    %1198 = vsyncpa [#allocation3], 1
    %1199 = vsyncpa [#allocation6], 1
    %1200 = vsyncpa [#allocation4], 1

</llo_original>
